<compile_context>
chip_gen: v7x
topology: tpu7x:2x2x1
jax: 0.10.0
libtpu: 0.0.40
codegen_flags: <defaults>
</compile_context>

<pallas_src>
import jax
import jax.numpy as jnp
from jax.experimental import pallas as pl
from jax.experimental.pallas import tpu as pltpu


def _tpu_topology():
    """Returns (vmem_capacity_bytes, has_two_tensorcores) with safe fallbacks."""
    vmem_cap = 64 * 1024 * 1024          # conservative default: v7x per-TC VMEM
    two_tc = True                        # conservative default: allow a >=2-step split
    try:
        info = pltpu.get_tpu_info()
        cap = getattr(info, "vmem_capacity_bytes", None)
        if cap:
            vmem_cap = int(cap)
    except Exception:
        pass
    try:
        kind = jax.devices()[0].device_kind.lower()
        two_tc = "v7" in kind            # among v5e/v6e/v7x only v7x has 2 TCs per chip
    except Exception:
        pass
    return vmem_cap, two_tc


def attention_block(x, params):
    """x: (B, C, H, W) float32.

    params = (cw, cb, w1, b1, g, beta, w2, b2):
      cw (C,1)  Conv2d(C->1,1x1) weight      cb (1,1)   its bias
      w1 (C,C)  transformer[0] weight        b1 (C,1)   its bias
      g  (C,1)  LayerNorm weight             beta (C,1) LayerNorm bias
      w2 (C,C)  transformer[-1] weight       b2 (C,1)   its bias
    """
    B, C, H, W = x.shape
    HW = H * W
    cw, cb, w1, b1, g, beta, w2, b2 = params
    itemsize = x.dtype.itemsize

    # No padding: the x/out block last dim equals the full array dim (HW), which
    # Pallas allows even when HW is not a multiple of 128 (masked vst on the
    # final partial lane group only).
    xr = x.reshape(B, C, HW)
    cw_row = cw.reshape(1, C)                              # attention conv weight as a row
    w1t = jnp.transpose(w1)                                # kernel computes feat @ w1.T
    w2t = jnp.transpose(w2)
    prow = jnp.stack([b1[:, 0], g[:, 0], beta[:, 0], b2[:, 0]], axis=0)   # (4, C) packed params
    cb_s = cb.reshape(1)                                   # scalar conv bias -> SMEM

    # --- generation-aware choice of BB (batch samples folded per grid step) ---
    vmem_cap, two_tc = _tpu_topology()
    vmem_limit = int(min(vmem_cap // 2, 96 * 1024 * 1024))     # 64 MiB on v5e/v6e, 32 MiB on v7x
    vmem_limit = max(vmem_limit, 16 * 1024 * 1024)
    # Honest accounting: double-buffered constant inputs (w1t, w2t, cw, prow) + scratch headroom.
    const_bytes = 2 * (2 * C * C + C + 4 * C) * itemsize
    headroom = 4 * 1024 * 1024
    budget = max(1, vmem_limit - const_bytes - headroom)       # for 2 bufs x (x in + out) blocks
    per_sample = C * HW * itemsize
    # TODO(synk): if a single sample's 4-buffer footprint ever exceeds `budget` (huge C*HW on
    # v7x's 64 MiB VMEM), tile HW on a second grid axis with an online-softmax formulation
    # instead of clamping BB to 1.
    max_bb = max(1, budget // (4 * per_sample))
    divisors = [d for d in range(1, B + 1) if B % d == 0 and d <= max_bb]
    if two_tc:
        preferred = [d for d in divisors if B // d >= 2]       # let both TCs pull HBM
        BB = max(preferred) if preferred else max(divisors)
    else:
        BB = max(divisors)                                     # single TC: fewest, largest steps
    grid = (B // BB,)

    def kernel(x_ref, cw_ref, prow_ref, w1t_ref, w2t_ref, cb_ref, o_ref):
        bb = x_ref.shape[0]

        # 1x1-conv attention logits on the MXU: (BB,1,C) @ (BB,C,HW) -> (BB,1,HW).
        cw_b = jnp.broadcast_to(cw_ref[...], (bb, 1, C))
        logits = jnp.einsum('boc,bcs->bos', cw_b, x_ref[...],
                            preferred_element_type=jnp.float32) + cb_ref[0]

        # softmax over spatial lanes; denominator reciprocal on the EUP.
        m = jnp.max(logits, axis=2, keepdims=True)             # (BB,1,1)
        p = jnp.exp(logits - m)
        denom = jnp.sum(p, axis=2, keepdims=True)
        attn = p * pl.reciprocal(denom, approx=True)           # (BB,1,HW)

        # weighted global pooling on the MXU: (BB,C,HW) x (BB,1,HW) -> (BB,C,1) -> (BB,C).
        feat = jnp.einsum('bcs,bos->bco', x_ref[...], attn,
                          preferred_element_type=jnp.float32).reshape(bb, C)

        # transformer: Conv1x1 -> LayerNorm([C,1,1]) -> ReLU -> Conv1x1 as plain 2-D matmuls.
        prow_v = prow_ref[...]                                 # (4, C)
        b1r = prow_v[0:1, :]
        gr = prow_v[1:2, :]
        betar = prow_v[2:3, :]
        b2r = prow_v[3:4, :]
        h = jnp.dot(feat, w1t_ref[...], preferred_element_type=jnp.float32) + b1r   # (BB,C)
        mean = jnp.mean(h, axis=1, keepdims=True)
        var = jnp.mean((h - mean) ** 2, axis=1, keepdims=True)
        hn = (h - mean) * jax.lax.rsqrt(var + 1e-5) * gr + betar
        hr = jnp.maximum(hn, 0.0)
        fine = jnp.dot(hr, w2t_ref[...], preferred_element_type=jnp.float32) + b2r  # (BB,C)

        # residual: broadcast the fine-grained channel vector over all positions.
        # Re-index x_ref here (fresh VMEM load) instead of reusing an earlier value.
        o_ref[...] = (x_ref[...] + fine[:, :, None]).astype(o_ref.dtype)

    # Advisory cost: this is a big memory-bound op (≈ 2 passes over x).
    cost = pl.CostEstimate(
        flops=int(4 * B * C * HW + 4 * B * C * C + B * C * HW),
        transcendentals=int(B * HW + 2 * B),
        bytes_accessed=int(2 * B * C * HW * itemsize + 2 * C * C * itemsize),
    )

    out = pl.pallas_call(
        kernel,
        out_shape=jax.ShapeDtypeStruct((B, C, HW), x.dtype),
        grid=grid,
        in_specs=[
            pl.BlockSpec((BB, C, HW), lambda i: (i, 0, 0)),     # x block (BB samples, full HW)
            pl.BlockSpec((1, C), lambda i: (0, 0)),             # attention conv weight row
            pl.BlockSpec((4, C), lambda i: (0, 0)),             # packed per-channel params
            pl.BlockSpec((C, C), lambda i: (0, 0)),             # transformer conv1 weight^T
            pl.BlockSpec((C, C), lambda i: (0, 0)),             # transformer conv2 weight^T
            pl.BlockSpec(memory_space=pltpu.MemorySpace.SMEM),  # scalar conv bias
        ],
        out_specs=pl.BlockSpec((BB, C, HW), lambda i: (i, 0, 0)),
        compiler_params=pltpu.CompilerParams(
            dimension_semantics=("parallel",),
            vmem_limit_bytes=vmem_limit,
        ),
        cost_estimate=cost,
    )(xr, cw_row, prow, w1t, w2t, cb_s)

    return out.reshape(B, C, H, W)


def attention_block_ref(x, params):
    """Pure-JAX reference mirroring the PyTorch forward exactly."""
    cw, cb, w1, b1, g, beta, w2, b2 = params
    B, C, H, W = x.shape
    xr = x.reshape(B, C, H * W)
    logits = jnp.sum(xr * cw[None], axis=1) + cb[0, 0]              # (B, HW)
    attn = jax.nn.softmax(logits, axis=-1)                          # (B, HW)
    feat = jnp.sum(xr * attn[:, None, :], axis=-1)                  # (B, C)
    h = feat @ w1.T + b1[:, 0]
    mean = jnp.mean(h, axis=-1, keepdims=True)
    var = jnp.mean((h - mean) ** 2, axis=-1, keepdims=True)
    hn = (h - mean) * jax.lax.rsqrt(var + 1e-5) * g[:, 0] + beta[:, 0]
    hr = jnp.maximum(hn, 0.0)
    fine = hr @ w2.T + b2[:, 0]                                     # (B, C)
    return x + fine[:, :, None, None]


def _make_params(key, C, scale=0.1):
    ks = jax.random.split(key, 8)
    cw = jax.random.normal(ks[0], (C, 1), jnp.float32) * scale       # Conv2d(C,1,1) weight
    cb = jax.random.normal(ks[1], (1, 1), jnp.float32) * scale       # Conv2d(C,1,1) bias
    w1 = jax.random.normal(ks[2], (C, C), jnp.float32) * scale       # transformer[0] weight
    b1 = jax.random.normal(ks[3], (C, 1), jnp.float32) * scale       # transformer[0] bias
    g = 1.0 + scale * jax.random.normal(ks[4], (C, 1), jnp.float32)  # LayerNorm weight
    beta = scale * jax.random.normal(ks[5], (C, 1), jnp.float32)     # LayerNorm bias
    # NOTE: the original __init__ zero-initializes the final conv (fine_grained == 0);
    # deterministic random weights here exercise the whole transformer path.
    w2 = jax.random.normal(ks[6], (C, C), jnp.float32) * scale       # transformer[-1] weight
    b2 = jax.random.normal(ks[7], (C, 1), jnp.float32) * scale       # transformer[-1] bias
    return (cw, cb, w1, b1, g, beta, w2, b2)


if __name__ == "__main__":
    key = jax.random.PRNGKey(0)
    # (B, C, H, W): lane-aligned HW, non-aligned HW (exercises the unpadded softmax /
    # pooling path), and B=4 (exercises batch folding / the BB heuristic).
    configs = [(2, 8, 16, 16), (2, 8, 15, 15), (4, 8, 16, 16)]
    for idx, (B, C, H, W) in enumerate(configs):
        kx, kp = jax.random.split(jax.random.fold_in(key, idx))
        x = jax.random.normal(kx, (B, C, H, W), jnp.float32)
        params = _make_params(kp, C)
        out = jax.block_until_ready(attention_block(x, params))
        ref = attention_block_ref(x, params)
        assert out.shape == x.shape and out.dtype == x.dtype
        err = float(jnp.max(jnp.abs(out - ref)))
        # 2e-3 headroom for the EUP approximate reciprocal in the softmax denominator.
        assert err < 2e-3, f"config {(B, C, H, W)}: max abs err = {err}"
    print("KERNEL_OK")
</pallas_src>

<mosaic_0001>
module attributes {stable_mosaic.version = 11 : i64} {
  func.func @kernel(%arg0: i32, %arg1: memref<2x8x256xf32, #tpu.memory_space<vmem>>, %arg2: memref<1x8xf32, #tpu.memory_space<vmem>>, %arg3: memref<4x8xf32, #tpu.memory_space<vmem>>, %arg4: memref<8x8xf32, #tpu.memory_space<vmem>>, %arg5: memref<8x8xf32, #tpu.memory_space<vmem>>, %arg6: memref<1xf32, #tpu.memory_space<smem>>, %arg7: memref<2x8x256xf32, #tpu.memory_space<vmem>>) attributes {dimension_semantics = [#tpu.dimension_semantics<parallel>], iteration_bounds = array<i64: 1>, scalar_prefetch = 0 : i64, scratch_operands = 0 : i64, tpu.core_type = #tpu.core_type<tc>, window_params = [{transform_indices = @transform_0, window_bounds = array<i64: 2, 8, 256>}, {pipeline_mode = #tpu.pipeline_mode<synchronous>, transform_indices = @transform_1, window_bounds = array<i64: 1, 8>}, {pipeline_mode = #tpu.pipeline_mode<synchronous>, transform_indices = @transform_2, window_bounds = array<i64: 4, 8>}, {pipeline_mode = #tpu.pipeline_mode<synchronous>, transform_indices = @transform_3, window_bounds = array<i64: 8, 8>}, {pipeline_mode = #tpu.pipeline_mode<synchronous>, transform_indices = @transform_4, window_bounds = array<i64: 8, 8>}, {transform_indices = @transform_5, window_bounds = array<i64: 1>}, {transform_indices = @transform_6, window_bounds = array<i64: 2, 8, 256>}]} {
    %c0 = arith.constant 0 : index
    %c0_0 = arith.constant 0 : index
    %0 = vector.load %arg2[%c0, %c0_0] : memref<1x8xf32, #tpu.memory_space<vmem>>, vector<1x8xf32>
    %1 = vector.shape_cast %0 : vector<1x8xf32> to vector<1x1x8xf32>
    %2 = vector.broadcast %1 : vector<1x1x8xf32> to vector<2x1x8xf32>
    %c0_1 = arith.constant 0 : index
    %c0_2 = arith.constant 0 : index
    %c0_3 = arith.constant 0 : index
    %3 = vector.load %arg1[%c0_1, %c0_2, %c0_3] : memref<2x8x256xf32, #tpu.memory_space<vmem>>, vector<2x8x256xf32>
    "tpu.trace_start"() <{level = 10 : i32, message = "boc,bcs->bos"}> : () -> ()
    %cst = arith.constant dense<0.000000e+00> : vector<2x1x256xf32>
    %4 = tpu.matmul %2, %3, %cst {dimension_numbers = #tpu.dot_dimension_numbers<[2], [1], [1], [2], [0, 0, 0, 1, 1, 2], [0], [0]>} : vector<2x1x8xf32>, vector<2x8x256xf32>, vector<2x1x256xf32> -> vector<2x1x256xf32>
    "tpu.trace_stop"() : () -> ()
    %c0_4 = arith.constant 0 : index
    %5 = memref.load %arg6[%c0_4] : memref<1xf32, #tpu.memory_space<smem>>
    %6 = vector.broadcast %5 : f32 to vector<2x1x256xf32>
    %7 = arith.addf %4, %6 : vector<2x1x256xf32>
    %cst_5 = arith.constant dense<0xFF800000> : vector<2x1xf32>
    %8 = vector.multi_reduction <maximumf>, %7, %cst_5 [2] : vector<2x1x256xf32> to vector<2x1xf32>
    %9 = vector.shape_cast %8 : vector<2x1xf32> to vector<2x1x1xf32>
    %10 = vector.broadcast %9 : vector<2x1x1xf32> to vector<2x1x256xf32>
    %11 = arith.subf %7, %10 : vector<2x1x256xf32>
    %12 = math.exp %11 : vector<2x1x256xf32>
    %cst_6 = arith.constant dense<0.000000e+00> : vector<2x1xf32>
    %13 = vector.multi_reduction <add>, %12, %cst_6 [2] : vector<2x1x256xf32> to vector<2x1xf32>
    %14 = vector.shape_cast %13 : vector<2x1xf32> to vector<2x1x1xf32>
    %15 = tpu.reciprocal %14 {approx = true} : vector<2x1x1xf32> -> vector<2x1x1xf32>
    %16 = vector.broadcast %15 : vector<2x1x1xf32> to vector<2x1x256xf32>
    %17 = arith.mulf %12, %16 : vector<2x1x256xf32>
    %c0_7 = arith.constant 0 : index
    %c0_8 = arith.constant 0 : index
    %c0_9 = arith.constant 0 : index
    %18 = vector.load %arg1[%c0_7, %c0_8, %c0_9] : memref<2x8x256xf32, #tpu.memory_space<vmem>>, vector<2x8x256xf32>
    "tpu.trace_start"() <{level = 10 : i32, message = "bcs,bos->bco"}> : () -> ()
    %cst_10 = arith.constant dense<0.000000e+00> : vector<2x8x1xf32>
    %19 = tpu.matmul %18, %17, %cst_10 {dimension_numbers = #tpu.dot_dimension_numbers<[2], [2], [1], [1], [0, 0, 0, 1, 1, 1], [0], [0]>} : vector<2x8x256xf32>, vector<2x1x256xf32>, vector<2x8x1xf32> -> vector<2x8x1xf32>
    "tpu.trace_stop"() : () -> ()
    %20 = vector.shape_cast %19 : vector<2x8x1xf32> to vector<2x8xf32>
    %c0_11 = arith.constant 0 : index
    %c0_12 = arith.constant 0 : index
    %21 = vector.load %arg3[%c0_11, %c0_12] : memref<4x8xf32, #tpu.memory_space<vmem>>, vector<4x8xf32>
    %22 = vector.extract_strided_slice %21 {offsets = [0, 0], sizes = [1, 8], strides = [1, 1]} : vector<4x8xf32> to vector<1x8xf32>
    %23 = vector.extract_strided_slice %21 {offsets = [1, 0], sizes = [1, 8], strides = [1, 1]} : vector<4x8xf32> to vector<1x8xf32>
    %24 = vector.extract_strided_slice %21 {offsets = [2, 0], sizes = [1, 8], strides = [1, 1]} : vector<4x8xf32> to vector<1x8xf32>
    %25 = vector.extract_strided_slice %21 {offsets = [3, 0], sizes = [1, 8], strides = [1, 1]} : vector<4x8xf32> to vector<1x8xf32>
    %c0_13 = arith.constant 0 : index
    %c0_14 = arith.constant 0 : index
    %26 = vector.load %arg4[%c0_13, %c0_14] : memref<8x8xf32, #tpu.memory_space<vmem>>, vector<8x8xf32>
    %cst_15 = arith.constant dense<0.000000e+00> : vector<2x8xf32>
    %27 = tpu.matmul %20, %26, %cst_15 {dimension_numbers = #tpu.dot_dimension_numbers<[1], [0], [0], [1], [0, 0, 1, 1], [], []>} : vector<2x8xf32>, vector<8x8xf32>, vector<2x8xf32> -> vector<2x8xf32>
    %28 = vector.broadcast %22 : vector<1x8xf32> to vector<2x8xf32>
    %29 = arith.addf %27, %28 : vector<2x8xf32>
    %cst_16 = arith.constant dense<0.000000e+00> : vector<2xf32>
    %30 = vector.multi_reduction <add>, %29, %cst_16 [1] : vector<2x8xf32> to vector<2xf32>
    %31 = vector.shape_cast %30 : vector<2xf32> to vector<2x1xf32>
    %cst_17 = arith.constant 8.000000e+00 : f32
    %32 = vector.broadcast %cst_17 : f32 to vector<2x1xf32>
    %33 = arith.divf %31, %32 : vector<2x1xf32>
    %34 = vector.broadcast %33 : vector<2x1xf32> to vector<2x8xf32>
    %35 = arith.subf %29, %34 : vector<2x8xf32>
    %36 = arith.mulf %35, %35 : vector<2x8xf32>
    %cst_18 = arith.constant dense<0.000000e+00> : vector<2xf32>
    %37 = vector.multi_reduction <add>, %36, %cst_18 [1] : vector<2x8xf32> to vector<2xf32>
    %38 = vector.shape_cast %37 : vector<2xf32> to vector<2x1xf32>
    %cst_19 = arith.constant 8.000000e+00 : f32
    %39 = vector.broadcast %cst_19 : f32 to vector<2x1xf32>
    %40 = arith.divf %38, %39 : vector<2x1xf32>
    %41 = vector.broadcast %33 : vector<2x1xf32> to vector<2x8xf32>
    %42 = arith.subf %29, %41 : vector<2x8xf32>
    %cst_20 = arith.constant 9.99999974E-6 : f32
    %43 = vector.broadcast %cst_20 : f32 to vector<2x1xf32>
    %44 = arith.addf %40, %43 : vector<2x1xf32>
    %45 = math.rsqrt %44 : vector<2x1xf32>
    %46 = vector.broadcast %45 : vector<2x1xf32> to vector<2x8xf32>
    %47 = arith.mulf %42, %46 : vector<2x8xf32>
    %48 = vector.broadcast %23 : vector<1x8xf32> to vector<2x8xf32>
    %49 = arith.mulf %47, %48 : vector<2x8xf32>
    %50 = vector.broadcast %24 : vector<1x8xf32> to vector<2x8xf32>
    %51 = arith.addf %49, %50 : vector<2x8xf32>
    %cst_21 = arith.constant 0.000000e+00 : f32
    %52 = vector.broadcast %cst_21 : f32 to vector<2x8xf32>
    %53 = arith.maximumf %51, %52 : vector<2x8xf32>
    %c0_22 = arith.constant 0 : index
    %c0_23 = arith.constant 0 : index
    %54 = vector.load %arg5[%c0_22, %c0_23] : memref<8x8xf32, #tpu.memory_space<vmem>>, vector<8x8xf32>
    %cst_24 = arith.constant dense<0.000000e+00> : vector<2x8xf32>
    %55 = tpu.matmul %53, %54, %cst_24 {dimension_numbers = #tpu.dot_dimension_numbers<[1], [0], [0], [1], [0, 0, 1, 1], [], []>} : vector<2x8xf32>, vector<8x8xf32>, vector<2x8xf32> -> vector<2x8xf32>
    %56 = vector.broadcast %25 : vector<1x8xf32> to vector<2x8xf32>
    %57 = arith.addf %55, %56 : vector<2x8xf32>
    %c0_25 = arith.constant 0 : index
    %c0_26 = arith.constant 0 : index
    %c0_27 = arith.constant 0 : index
    %58 = vector.load %arg1[%c0_25, %c0_26, %c0_27] : memref<2x8x256xf32, #tpu.memory_space<vmem>>, vector<2x8x256xf32>
    %59 = vector.shape_cast %57 : vector<2x8xf32> to vector<2x8x1xf32>
    %60 = vector.broadcast %59 : vector<2x8x1xf32> to vector<2x8x256xf32>
    %61 = arith.addf %58, %60 : vector<2x8x256xf32>
    %c0_28 = arith.constant 0 : index
    %c0_29 = arith.constant 0 : index
    %c0_30 = arith.constant 0 : index
    %62 = vector.load %arg7[%c0_28, %c0_29, %c0_30] : memref<2x8x256xf32, #tpu.memory_space<vmem>>, vector<2x8x256xf32>
    tpu.vector_store %arg7[%c0_28, %c0_29, %c0_30], %61 {strides = array<i32>} : memref<2x8x256xf32, #tpu.memory_space<vmem>>, vector<2x8x256xf32>,
    return
  }
  func.func @transform_0(%arg0: i32) -> (i32, i32, i32) {
    %c0_i32 = arith.constant 0 : i32
    %c0_i32_0 = arith.constant 0 : i32
    %c0_i32_1 = arith.constant 0 : i32
    return %arg0, %c0_i32, %c0_i32_0 : i32, i32, i32
  }
  func.func @transform_1(%arg0: i32) -> (i32, i32) {
    %c0_i32 = arith.constant 0 : i32
    %c0_i32_0 = arith.constant 0 : i32
    %c0_i32_1 = arith.constant 0 : i32
    return %c0_i32, %c0_i32_0 : i32, i32
  }
  func.func @transform_2(%arg0: i32) -> (i32, i32) {
    %c0_i32 = arith.constant 0 : i32
    %c0_i32_0 = arith.constant 0 : i32
    %c0_i32_1 = arith.constant 0 : i32
    return %c0_i32, %c0_i32_0 : i32, i32
  }
  func.func @transform_3(%arg0: i32) -> (i32, i32) {
    %c0_i32 = arith.constant 0 : i32
    %c0_i32_0 = arith.constant 0 : i32
    %c0_i32_1 = arith.constant 0 : i32
    return %c0_i32, %c0_i32_0 : i32, i32
  }
  func.func @transform_4(%arg0: i32) -> (i32, i32) {
    %c0_i32 = arith.constant 0 : i32
    %c0_i32_0 = arith.constant 0 : i32
    %c0_i32_1 = arith.constant 0 : i32
    return %c0_i32, %c0_i32_0 : i32, i32
  }
  func.func @transform_5(%arg0: i32) -> i32 {
    %c0_i32 = arith.constant 0 : i32
    %c0_i32_0 = arith.constant 0 : i32
    return %c0_i32 : i32
  }
  func.func @transform_6(%arg0: i32) -> (i32, i32, i32) {
    %c0_i32 = arith.constant 0 : i32
    %c0_i32_0 = arith.constant 0 : i32
    %c0_i32_1 = arith.constant 0 : i32
    return %arg0, %c0_i32, %c0_i32_0 : i32, i32, i32
  }
}

</mosaic_0001>

<llo_original>
// kernel: tpu_custom_call.1
$region0: #{tpu_custom_call.1}
  #allocation0 [shape = 'u32[]', space=smem, size = 0x4, offset = 0x4, fixed_abs, tag = 'smem constant byte address 0x4 - core index']
  #allocation1 [shape = 'u32[144,128]{1,0:T(1,128)}', space=vmem, size = 0x12000, scoped, tag = 'internal scratch']
  #allocation2 [shape = 'f32[1]{0:T(128)S(6)}', space=smem, size = 0x200, scoped, tag = 'scoped memory for tpu_custom_call.1']
  %s0 = inlined_call_operand.hbm [shape: f32[2,8,256], index: 0, kind: input, shape index: {}]
  %s1 = inlined_call_operand.vmem [shape: f32[1,8], index: 1, kind: input, shape index: {}]
  %s2 = inlined_call_operand.hbm [shape: f32[4,8], index: 2, kind: input, shape index: {}]
  %s3 = inlined_call_operand.vmem [shape: f32[8,8], index: 3, kind: input, shape index: {}]
  %s4 = inlined_call_operand.vmem [shape: f32[8,8], index: 4, kind: input, shape index: {}]
  %s5 = inlined_call_operand.<no memory space> [shape: f32[1], index: 5, kind: input, shape index: {}]
  %s6 = inlined_call_operand.hbm [shape: f32[2,8,256], index: 6, kind: output, shape index: {}]
  %s7 = sld [smem:[#allocation0]]
  $region42: #{tpu_custom_call.1} parent=0
    _
  %s9 = ssub.s32 1, %s7
  %s10 = scalar_select 0, %s9, %s7
  %11 = sst [smem:[#allocation2]] %s5
  $region1: #{tpu_custom_call.1} parent=0
    #allocation3 [shape = 'u8[16384]{0}', space=vmem, size = 0x4000, scoped, tag = 'input window, operand 0, single buffered']
    #allocation4 [shape = 's32[1]{0}', space=sflag, size = 0x4, scoped, tag = 'scoped memory for tpu_custom_call.1']
    #allocation5 [shape = 's32[1]{0}', space=sflag, size = 0x4, scoped, tag = 'scoped memory for tpu_custom_call.1']
    #allocation6 [shape = 'u8[2048]{0}', space=vmem, size = 0x800, scoped, tag = 'input window, operand 2, single buffered']
    #allocation7 [shape = 's32[1]{0}', space=sflag, size = 0x4, scoped, tag = 'scoped memory for tpu_custom_call.1']
    #allocation8 [shape = 'u8[16384]{0}', space=vmem, size = 0x4000, scoped, tag = 'output window, operand 0, single buffered']
    %12 = vsyncpa [#allocation4], 0
    %13 = vsyncpa [#allocation7], 0
    %14 = vsyncpa [#allocation5], 0
    // Predicated region
    $region2: #{tpu_custom_call.1} parent=1 // pred_check
      _
    $region3: #{tpu_custom_call.1} parent=1 // pred_check_branch
      %16 = sbr.rel (0) target = $region5
    $region4: #{tpu_custom_call.1} parent=1 // pred_region
      %s18 = ssub.s32 512, 512
      %19 = vsyncadd [#allocation4], %s18
      %s20 = sshll.u32 [#allocation3], 4
      %s21 = int_to_ptr.vmem [resolvable:$true] %s20
      %26 = dma.hbm_to_vmem [thread:$0]  %s0, 512, %s21, [#allocation4], 256, 256, 16
    $region5: #{tpu_custom_call.1} parent=1 // pred_fallthru
      _
    // Predicated region
    $region6: #{tpu_custom_call.1} parent=1 // pred_check
      _
    $region7: #{tpu_custom_call.1} parent=1 // pred_check_branch
      %28 = sbr.rel (0) target = $region9
    $region8: #{tpu_custom_call.1} parent=1 // pred_region
      _
    $region9: #{tpu_custom_call.1} parent=1 // pred_fallthru
      _
    // Predicated region
    $region10: #{tpu_custom_call.1} parent=1 // pred_check
      _
    $region11: #{tpu_custom_call.1} parent=1 // pred_check_branch
      %30 = sbr.rel (0) target = $region13
    $region12: #{tpu_custom_call.1} parent=1 // pred_region
      %s32 = ssub.s32 64, 64
      %33 = vsyncadd [#allocation7], %s32
      %s35 = sshll.u32 [#allocation6], 4
      %s36 = int_to_ptr.vmem [resolvable:$true] %s35
      %38 = dma.hbm_to_vmem [thread:$0]  %s2, 64, %s36, [#allocation7]
    $region13: #{tpu_custom_call.1} parent=1 // pred_fallthru
      _
    // Predicated region
    $region14: #{tpu_custom_call.1} parent=1 // pred_check
      _
    $region15: #{tpu_custom_call.1} parent=1 // pred_check_branch
      %40 = sbr.rel (0) target = $region17
    $region16: #{tpu_custom_call.1} parent=1 // pred_region
      _
    $region17: #{tpu_custom_call.1} parent=1 // pred_fallthru
      _
    // Predicated region
    $region18: #{tpu_custom_call.1} parent=1 // pred_check
      _
    $region19: #{tpu_custom_call.1} parent=1 // pred_check_branch
      %42 = sbr.rel (0) target = $region21
    $region20: #{tpu_custom_call.1} parent=1 // pred_region
      _
    $region21: #{tpu_custom_call.1} parent=1 // pred_fallthru
      _
    // Predicated region
    $region22: #{tpu_custom_call.1} parent=1 // pred_check
      _
    $region23: #{tpu_custom_call.1} parent=1 // pred_check_branch
      %44 = sbr.rel (0) target = $region25
    $region24: #{tpu_custom_call.1} parent=1 // pred_region
      _
    $region25: #{tpu_custom_call.1} parent=1 // pred_fallthru
      _
    // Predicated region
    $region26: #{tpu_custom_call.1} parent=1 // pred_check
      _
    $region27: #{tpu_custom_call.1} parent=1 // pred_check_branch
      %46 = sbr.rel (0) target = $region29
    $region28: #{tpu_custom_call.1} parent=1 // pred_region
      %47 = dma.done [#allocation4], 512
    $region29: #{tpu_custom_call.1} parent=1 // pred_fallthru
      _
    // Predicated region
    $region30: #{tpu_custom_call.1} parent=1 // pred_check
      _
    $region31: #{tpu_custom_call.1} parent=1 // pred_check_branch
      %49 = sbr.rel (0) target = $region33
    $region32: #{tpu_custom_call.1} parent=1 // pred_region
      %50 = dma.done [#allocation7], 64
    $region33: #{tpu_custom_call.1} parent=1 // pred_fallthru
      _
    %v51 = vld [vmem:[%s1] sm:$0x1]
    %v52 = vld [vmem:[#allocation3] sm:$0xff]
    %v53 = vld [vmem:[#allocation3 + $0x8] sm:$0xff]
    %v54 = vld [vmem:[#allocation3 + $0x10] sm:$0xff]
    %v55 = vld [vmem:[#allocation3 + $0x18] sm:$0xff]
    %s56 = sld [smem:[#allocation2]]
    %v57 = vstv %s56
    %vm58 = vcmask 64512
    %v60 = vsel %vm58, %v51, 0
    %62 = vmatprep.subr.mxu0 %v53
    %63 = vmatpush1.msra.mxu0 %v52
    %64 = vmatprep.subr.mxu0 0.0
    %65 = vmatpush1.msra.mxu0 0.0
    %66 = vmatprep.subr.mxu0 0.0
    %67 = vmatpush1.msra.mxu0 0.0
    %68 = vmatprep.subr.mxu0 0.0
    %69 = vmatpush1.msra.mxu0 0.0
    %70 = vmatprep.subr.mxu0 0.0
    %71 = vmatpush1.msra.mxu0 0.0
    %72 = vmatprep.subr.mxu0 0.0
    %73 = vmatpush1.msra.mxu0 0.0
    %74 = vmatprep.subr.mxu0 0.0
    %75 = vmatpush1.msra.mxu0 0.0
    %76 = vmatprep.subr.mxu0 0.0
    %77 = vmatpush1.msra.mxu0 0.0
    %78 = vmatprep.subr.mxu0 0.0
    %79 = vmatpush1.msra.mxu0 0.0
    %80 = vmatprep.subr.mxu0 0.0
    %81 = vmatpush1.msra.mxu0 0.0
    %82 = vmatprep.subr.mxu0 0.0
    %83 = vmatpush1.msra.mxu0 0.0
    %84 = vmatprep.subr.mxu0 0.0
    %85 = vmatpush1.msra.mxu0 0.0
    %86 = vmatprep.subr.mxu0 0.0
    %87 = vmatpush1.msra.mxu0 0.0
    %88 = vmatprep.subr.mxu0 0.0
    %89 = vmatpush1.msra.mxu0 0.0
    %90 = vmatprep.subr.mxu0 0.0
    %91 = vmatpush1.msra.mxu0 0.0
    %92 = vmatprep.subr.mxu0 0.0
    %93 = vmatpush1.msra.mxu0 0.0
    %94 = vmatprep.subr.mxu0 0.0
    %95 = vmatpush1.msra.mxu0 0.0
    %96 = vmatprep.subr.mxu0 0.0
    %97 = vmatpush1.msra.mxu0 0.0
    %98 = vmatprep.subr.mxu0 0.0
    %99 = vmatpush1.msra.mxu0 0.0
    %100 = vmatprep.subr.mxu0 0.0
    %101 = vmatpush1.msra.mxu0 0.0
    %102 = vmatprep.subr.mxu0 0.0
    %103 = vmatpush1.msra.mxu0 0.0
    %104 = vmatprep.subr.mxu0 0.0
    %105 = vmatpush1.msra.mxu0 0.0
    %106 = vmatprep.subr.mxu0 0.0
    %107 = vmatpush1.msra.mxu0 0.0
    %108 = vmatprep.subr.mxu0 0.0
    %109 = vmatpush1.msra.mxu0 0.0
    %110 = vmatprep.subr.mxu0 0.0
    %111 = vmatpush1.msra.mxu0 0.0
    %112 = vmatprep.subr.mxu0 0.0
    %113 = vmatpush1.msra.mxu0 0.0
    %114 = vmatprep.subr.mxu0 0.0
    %115 = vmatpush1.msra.mxu0 0.0
    %116 = vmatprep.subr.mxu0 0.0
    %117 = vmatpush1.msra.mxu0 0.0
    %118 = vmatprep.subr.mxu0 0.0
    %119 = vmatpush1.msra.mxu0 0.0
    %120 = vmatprep.subr.mxu0 0.0
    %121 = vmatpush1.msra.mxu0 0.0
    %122 = vmatprep.subr.mxu0 0.0
    %123 = vmatpush1.msra.mxu0 0.0
    %124 = vmatprep.subr.mxu0 0.0
    %125 = vmatpush1.msra.mxu0 0.0
    %126 = vmatprep.mubr.f32.mxu0 0.0
    %127 = vmatmul.mubr.f32.gmra.mrb[0].mxu0 %v60
    %v128 = vpop.f32.mrb[0].mxu0
    %v129 = vadd.f32 %v57, %v128
    %v130 = vpop.f32.mrb[0].mxu0
    %v131 = vadd.f32 %v57, %v130
    %132 = vdwg.mxu0
    %133 = vmatprep.subr.mxu0 %v55
    %134 = vmatpush1.msra.mxu0 %v54
    %135 = vmatprep.subr.mxu0 0.0
    %136 = vmatpush1.msra.mxu0 0.0
    %137 = vmatprep.subr.mxu0 0.0
    %138 = vmatpush1.msra.mxu0 0.0
    %139 = vmatprep.subr.mxu0 0.0
    %140 = vmatpush1.msra.mxu0 0.0
    %141 = vmatprep.subr.mxu0 0.0
    %142 = vmatpush1.msra.mxu0 0.0
    %143 = vmatprep.subr.mxu0 0.0
    %144 = vmatpush1.msra.mxu0 0.0
    %145 = vmatprep.subr.mxu0 0.0
    %146 = vmatpush1.msra.mxu0 0.0
    %147 = vmatprep.subr.mxu0 0.0
    %148 = vmatpush1.msra.mxu0 0.0
    %149 = vmatprep.subr.mxu0 0.0
    %150 = vmatpush1.msra.mxu0 0.0
    %151 = vmatprep.subr.mxu0 0.0
    %152 = vmatpush1.msra.mxu0 0.0
    %153 = vmatprep.subr.mxu0 0.0
    %154 = vmatpush1.msra.mxu0 0.0
    %155 = vmatprep.subr.mxu0 0.0
    %156 = vmatpush1.msra.mxu0 0.0
    %157 = vmatprep.subr.mxu0 0.0
    %158 = vmatpush1.msra.mxu0 0.0
    %159 = vmatprep.subr.mxu0 0.0
    %160 = vmatpush1.msra.mxu0 0.0
    %161 = vmatprep.subr.mxu0 0.0
    %162 = vmatpush1.msra.mxu0 0.0
    %163 = vmatprep.subr.mxu0 0.0
    %164 = vmatpush1.msra.mxu0 0.0
    %165 = vmatprep.subr.mxu0 0.0
    %166 = vmatpush1.msra.mxu0 0.0
    %167 = vmatprep.subr.mxu0 0.0
    %168 = vmatpush1.msra.mxu0 0.0
    %169 = vmatprep.subr.mxu0 0.0
    %170 = vmatpush1.msra.mxu0 0.0
    %171 = vmatprep.subr.mxu0 0.0
    %172 = vmatpush1.msra.mxu0 0.0
    %173 = vmatprep.subr.mxu0 0.0
    %174 = vmatpush1.msra.mxu0 0.0
    %175 = vmatprep.subr.mxu0 0.0
    %176 = vmatpush1.msra.mxu0 0.0
    %177 = vmatprep.subr.mxu0 0.0
    %178 = vmatpush1.msra.mxu0 0.0
    %179 = vmatprep.subr.mxu0 0.0
    %180 = vmatpush1.msra.mxu0 0.0
    %181 = vmatprep.subr.mxu0 0.0
    %182 = vmatpush1.msra.mxu0 0.0
    %183 = vmatprep.subr.mxu0 0.0
    %184 = vmatpush1.msra.mxu0 0.0
    %185 = vmatprep.subr.mxu0 0.0
    %186 = vmatpush1.msra.mxu0 0.0
    %187 = vmatprep.subr.mxu0 0.0
    %188 = vmatpush1.msra.mxu0 0.0
    %189 = vmatprep.subr.mxu0 0.0
    %190 = vmatpush1.msra.mxu0 0.0
    %191 = vmatprep.subr.mxu0 0.0
    %192 = vmatpush1.msra.mxu0 0.0
    %193 = vmatprep.subr.mxu0 0.0
    %194 = vmatpush1.msra.mxu0 0.0
    %195 = vmatprep.subr.mxu0 0.0
    %196 = vmatpush1.msra.mxu0 0.0
    %197 = vmatprep.mubr.f32.mxu0 0.0
    %198 = vmatmul.mubr.f32.gmra.mrb[0].mxu0 %v60
    %v199 = vpop.f32.mrb[0].mxu0
    %v200 = vadd.f32 %v57, %v199
    %v201 = vpop.f32.mrb[0].mxu0
    %v202 = vadd.f32 %v57, %v201
    %203 = vdwg.mxu0
    %vm204 = vcmask 1040384
    %v205 = vsel %vm204, %v129, -inf
    %v206 = vsel %vm204, %v131, -inf
    %v207 = vmax.f32 %v205, %v206
    %208 = vmax.xlane.f32.xlu0 %v207
    %v209 = vpop.xlane.xlu0 %208
    %v210 = vsel %vm204, %v200, -inf
    %v211 = vsel %vm204, %v202, -inf
    %v212 = vmax.f32 %v210, %v211
    %213 = vmax.xlane.f32.xlu0 %v212
    %v214 = vpop.xlane.xlu0 %213
    %v215 = vsub.f32 %v129, %v209
    %v216 = vsub.f32 %v131, %v209
    %v217 = vsub.f32 %v200, %v214
    %v218 = vsub.f32 %v202, %v214
    %v219 = vmul.f32 %v215, 1.442695
    %v220 = vpow.pop %v219
    %v221 = vmul.f32 %v216, 1.442695
    %v222 = vpow.pop %v221
    %v223 = vmul.f32 %v217, 1.442695
    %v224 = vpow.pop %v223
    %v225 = vmul.f32 %v218, 1.442695
    %v226 = vpow.pop %v225
    %v227 = vsel %vm204, %v220, 0.0
    %v228 = vsel %vm204, %v222, 0.0
    %v229 = vadd.f32 %v227, %v228
    %230 = vadd.xlane.f32.xlu0 %v229
    %v231 = vpop.xlane.xlu0 %230
    %v232 = vsel %vm204, %v224, 0.0
    %v233 = vsel %vm204, %v226, 0.0
    %v234 = vadd.f32 %v232, %v233
    %235 = vadd.xlane.f32.xlu0 %v234
    %v236 = vpop.xlane.xlu0 %235
    %v237 = vrcp.pop %v231
    %v238 = vrcp.pop %v236
    %v239 = vmul.f32 %v220, %v237
    %v240 = vmul.f32 %v222, %v237
    %v241 = vmul.f32 %v224, %v238
    %v242 = vmul.f32 %v226, %v238
    %v243 = vld [vmem:[#allocation3] sm:$0xff]
    %v244 = vld [vmem:[#allocation3 + $0x8] sm:$0xff]
    %v245 = vld [vmem:[#allocation3 + $0x10] sm:$0xff]
    %v246 = vld [vmem:[#allocation3 + $0x18] sm:$0xff]
    %v247 = vlaneseq
    %v248 = vshrl.u32 %v247, 7
    %v249 = vsub.s32 0, %v248
    %v250 = vrot.slane %v239, %v249
    %v251 = vlaneseq
    %v252 = vshrl.u32 %v251, 7
    %v253 = vsub.s32 0, %v252
    %v254 = vrot.slane %v240, %v253
    %v255 = vmul.f32 %v243, %v250
    %v256 = vmul.f32 %v244, %v254
    %v257 = vadd.f32 %v255, %v256
    %258 = vadd.xlane.f32.xlu0 %v257
    %v259 = vpop.xlane.xlu0 %258
    %v260 = vlaneseq
    %v261 = vshrl.u32 %v260, 7
    %v262 = vsub.s32 0, %v261
    %v263 = vrot.slane %v241, %v262
    %v264 = vlaneseq
    %v265 = vshrl.u32 %v264, 7
    %v266 = vsub.s32 0, %v265
    %v267 = vrot.slane %v242, %v266
    %v268 = vmul.f32 %v245, %v263
    %v269 = vmul.f32 %v246, %v267
    %v270 = vadd.f32 %v268, %v269
    %271 = vadd.xlane.f32.xlu0 %v270
    %v272 = vpop.xlane.xlu0 %271
    %v273 = vld [vmem:[#allocation6] sm:$0xf]
    %v274 = vld [vmem:[%s3] sm:$0xff]
    %v275 = vlaneseq
    %v276 = vshrl.u32 %v275, 7
    %v277 = vsub.s32 0, %v276
    %v278 = vrot.slane %v273, %v277
    %281 = vset.pattern.permute.xlu0 0
    %282 = vperm.xlu0 %281, %v259
    %v283 = vpop.permute.xlu0 %282
    %284 = vset.pattern.permute.xlu0 0
    %285 = vperm.xlu0 %284, %v272
    %v286 = vpop.permute.xlu0 %285
    %v287 = vlaneseq
    %v288 = vand.u32 %v287, 127
    %v289 = vlaneseq
    %v290 = vshrl.u32 %v289, 7
    %v291 = vsub.s32 %v288, %v290
    %v292 = vrot.slane %v283, %v291
    %v293 = vlaneseq
    %v294 = vshrl.u32 %v293, 7
    %v295 = vsub.s32 %v288, %v294
    %v296 = vrot.slane %v286, %v295
    %vm297 = vcmask 1041409
    %v298 = vsel %vm297, %v296, %v292
    %v299 = vsel %vm58, %v298, 0
    %301 = vmatprep.subr.mxu0 0.0
    %302 = vmatpush1.msra.mxu0 %v274
    %303 = vmatprep.subr.mxu0 0.0
    %304 = vmatpush1.msra.mxu0 0.0
    %305 = vmatprep.subr.mxu0 0.0
    %306 = vmatpush1.msra.mxu0 0.0
    %307 = vmatprep.subr.mxu0 0.0
    %308 = vmatpush1.msra.mxu0 0.0
    %309 = vmatprep.subr.mxu0 0.0
    %310 = vmatpush1.msra.mxu0 0.0
    %311 = vmatprep.subr.mxu0 0.0
    %312 = vmatpush1.msra.mxu0 0.0
    %313 = vmatprep.subr.mxu0 0.0
    %314 = vmatpush1.msra.mxu0 0.0
    %315 = vmatprep.subr.mxu0 0.0
    %316 = vmatpush1.msra.mxu0 0.0
    %317 = vmatprep.subr.mxu0 0.0
    %318 = vmatpush1.msra.mxu0 0.0
    %319 = vmatprep.subr.mxu0 0.0
    %320 = vmatpush1.msra.mxu0 0.0
    %321 = vmatprep.subr.mxu0 0.0
    %322 = vmatpush1.msra.mxu0 0.0
    %323 = vmatprep.subr.mxu0 0.0
    %324 = vmatpush1.msra.mxu0 0.0
    %325 = vmatprep.subr.mxu0 0.0
    %326 = vmatpush1.msra.mxu0 0.0
    %327 = vmatprep.subr.mxu0 0.0
    %328 = vmatpush1.msra.mxu0 0.0
    %329 = vmatprep.subr.mxu0 0.0
    %330 = vmatpush1.msra.mxu0 0.0
    %331 = vmatprep.subr.mxu0 0.0
    %332 = vmatpush1.msra.mxu0 0.0
    %333 = vmatprep.subr.mxu0 0.0
    %334 = vmatpush1.msra.mxu0 0.0
    %335 = vmatprep.subr.mxu0 0.0
    %336 = vmatpush1.msra.mxu0 0.0
    %337 = vmatprep.subr.mxu0 0.0
    %338 = vmatpush1.msra.mxu0 0.0
    %339 = vmatprep.subr.mxu0 0.0
    %340 = vmatpush1.msra.mxu0 0.0
    %341 = vmatprep.subr.mxu0 0.0
    %342 = vmatpush1.msra.mxu0 0.0
    %343 = vmatprep.subr.mxu0 0.0
    %344 = vmatpush1.msra.mxu0 0.0
    %345 = vmatprep.subr.mxu0 0.0
    %346 = vmatpush1.msra.mxu0 0.0
    %347 = vmatprep.subr.mxu0 0.0
    %348 = vmatpush1.msra.mxu0 0.0
    %349 = vmatprep.subr.mxu0 0.0
    %350 = vmatpush1.msra.mxu0 0.0
    %351 = vmatprep.subr.mxu0 0.0
    %352 = vmatpush1.msra.mxu0 0.0
    %353 = vmatprep.subr.mxu0 0.0
    %354 = vmatpush1.msra.mxu0 0.0
    %355 = vmatprep.subr.mxu0 0.0
    %356 = vmatpush1.msra.mxu0 0.0
    %357 = vmatprep.subr.mxu0 0.0
    %358 = vmatpush1.msra.mxu0 0.0
    %359 = vmatprep.subr.mxu0 0.0
    %360 = vmatpush1.msra.mxu0 0.0
    %361 = vmatprep.subr.mxu0 0.0
    %362 = vmatpush1.msra.mxu0 0.0
    %363 = vmatprep.subr.mxu0 0.0
    %364 = vmatpush1.msra.mxu0 0.0
    %365 = vmatprep.mubr.f32.mxu0 0.0
    %366 = vmatmul.mubr.f32.gmra.mrb[0].mxu0 %v299
    %v367 = vpop.f32.mrb[0].mxu0
    %v368 = vadd.f32 %v278, %v367
    %v369 = vpop.f32.mrb[0].mxu0
    %370 = vdwg.mxu0
    %vm371 = vcmask 58368
    %v372 = vsel %vm371, %v368, 0.0
    %373 = vadd.xlane.f32.xlu0 %v372
    %v374 = vpop.xlane.xlu0 %373
    %v375 = vrcp.pop 8.0
    %v376 = vmul.f32 %v374, %v375
    %v377 = vsub.f32 %v368, %v376
    %v378 = vmul.f32 %v377, %v377
    %v379 = vsel %vm371, %v378, 0.0
    %380 = vadd.xlane.f32.xlu0 %v379
    %v381 = vpop.xlane.xlu0 %380
    %v382 = vmul.f32 %v381, %v375
    %v383 = vadd.f32 %v382, 1e-05
    %v384 = vrsqrt.pop %v383
    %v385 = vmul.f32 %v377, %v384
    %v386 = vlaneseq
    %v387 = vshrl.u32 %v386, 7
    %v388 = vsub.s32 1, %v387
    %v389 = vrot.slane %v273, %v388
    %v390 = vmul.f32 %v385, %v389
    %v391 = vlaneseq
    %v392 = vshrl.u32 %v391, 7
    %v393 = vsub.s32 2, %v392
    %v394 = vrot.slane %v273, %v393
    %v395 = vadd.f32 %v390, %v394
    %v396 = vmax.f32 %v395, 0.0
    %v397 = vld [vmem:[%s4] sm:$0xff]
    %v398 = vlaneseq
    %v399 = vshrl.u32 %v398, 7
    %v400 = vsub.s32 3, %v399
    %v401 = vrot.slane %v273, %v400
    %v403 = vsel %vm58, %v396, 0
    %405 = vmatprep.subr.mxu0 0.0
    %406 = vmatpush1.msra.mxu0 %v397
    %407 = vmatprep.subr.mxu0 0.0
    %408 = vmatpush1.msra.mxu0 0.0
    %409 = vmatprep.subr.mxu0 0.0
    %410 = vmatpush1.msra.mxu0 0.0
    %411 = vmatprep.subr.mxu0 0.0
    %412 = vmatpush1.msra.mxu0 0.0
    %413 = vmatprep.subr.mxu0 0.0
    %414 = vmatpush1.msra.mxu0 0.0
    %415 = vmatprep.subr.mxu0 0.0
    %416 = vmatpush1.msra.mxu0 0.0
    %417 = vmatprep.subr.mxu0 0.0
    %418 = vmatpush1.msra.mxu0 0.0
    %419 = vmatprep.subr.mxu0 0.0
    %420 = vmatpush1.msra.mxu0 0.0
    %421 = vmatprep.subr.mxu0 0.0
    %422 = vmatpush1.msra.mxu0 0.0
    %423 = vmatprep.subr.mxu0 0.0
    %424 = vmatpush1.msra.mxu0 0.0
    %425 = vmatprep.subr.mxu0 0.0
    %426 = vmatpush1.msra.mxu0 0.0
    %427 = vmatprep.subr.mxu0 0.0
    %428 = vmatpush1.msra.mxu0 0.0
    %429 = vmatprep.subr.mxu0 0.0
    %430 = vmatpush1.msra.mxu0 0.0
    %431 = vmatprep.subr.mxu0 0.0
    %432 = vmatpush1.msra.mxu0 0.0
    %433 = vmatprep.subr.mxu0 0.0
    %434 = vmatpush1.msra.mxu0 0.0
    %435 = vmatprep.subr.mxu0 0.0
    %436 = vmatpush1.msra.mxu0 0.0
    %437 = vmatprep.subr.mxu0 0.0
    %438 = vmatpush1.msra.mxu0 0.0
    %439 = vmatprep.subr.mxu0 0.0
    %440 = vmatpush1.msra.mxu0 0.0
    %441 = vmatprep.subr.mxu0 0.0
    %442 = vmatpush1.msra.mxu0 0.0
    %443 = vmatprep.subr.mxu0 0.0
    %444 = vmatpush1.msra.mxu0 0.0
    %445 = vmatprep.subr.mxu0 0.0
    %446 = vmatpush1.msra.mxu0 0.0
    %447 = vmatprep.subr.mxu0 0.0
    %448 = vmatpush1.msra.mxu0 0.0
    %449 = vmatprep.subr.mxu0 0.0
    %450 = vmatpush1.msra.mxu0 0.0
    %451 = vmatprep.subr.mxu0 0.0
    %452 = vmatpush1.msra.mxu0 0.0
    %453 = vmatprep.subr.mxu0 0.0
    %454 = vmatpush1.msra.mxu0 0.0
    %455 = vmatprep.subr.mxu0 0.0
    %456 = vmatpush1.msra.mxu0 0.0
    %457 = vmatprep.subr.mxu0 0.0
    %458 = vmatpush1.msra.mxu0 0.0
    %459 = vmatprep.subr.mxu0 0.0
    %460 = vmatpush1.msra.mxu0 0.0
    %461 = vmatprep.subr.mxu0 0.0
    %462 = vmatpush1.msra.mxu0 0.0
    %463 = vmatprep.subr.mxu0 0.0
    %464 = vmatpush1.msra.mxu0 0.0
    %465 = vmatprep.subr.mxu0 0.0
    %466 = vmatpush1.msra.mxu0 0.0
    %467 = vmatprep.subr.mxu0 0.0
    %468 = vmatpush1.msra.mxu0 0.0
    %469 = vmatprep.mubr.f32.mxu0 0.0
    %470 = vmatmul.mubr.f32.gmra.mrb[0].mxu0 %v403
    %v471 = vpop.f32.mrb[0].mxu0
    %v472 = vadd.f32 %v401, %v471
    %v473 = vpop.f32.mrb[0].mxu0
    %474 = vdwg.mxu0
    %v475 = vld [vmem:[#allocation3] sm:$0xff]
    %v476 = vld [vmem:[#allocation3 + $0x8] sm:$0xff]
    %v477 = vld [vmem:[#allocation3 + $0x10] sm:$0xff]
    %v478 = vld [vmem:[#allocation3 + $0x18] sm:$0xff]
    %v479 = vlaneseq
    %v480 = vshrl.u32 %v479, 7
    %v481 = vsub.s32 0, %v480
    %v482 = vrot.slane %v472, %v481
    %484 = vbcast.lane.b32.xlu0 %v482, 256
    %v485 = vpop.permute.xlu0 %484
    %v486 = vlaneseq
    %v487 = vshrl.u32 %v486, 7
    %v488 = vsub.s32 1, %v487
    %v489 = vrot.slane %v472, %v488
    %491 = vbcast.lane.b32.xlu0 %v489, 256
    %v492 = vpop.permute.xlu0 %491
    %v493 = vadd.f32 %v475, %v485
    %v494 = vadd.f32 %v476, %v485
    %v495 = vadd.f32 %v477, %v492
    %v496 = vadd.f32 %v478, %v492
    %497 = vst [vmem:[#allocation8] sm:$0xff] %v493
    %498 = vst [vmem:[#allocation8 + $0x8] sm:$0xff] %v494
    %499 = vst [vmem:[#allocation8 + $0x10] sm:$0xff] %v495
    %500 = vst [vmem:[#allocation8 + $0x18] sm:$0xff] %v496
    // Predicated region
    $region34: #{tpu_custom_call.1} parent=1 // pred_check
      _
    $region35: #{tpu_custom_call.1} parent=1 // pred_check_branch
      %502 = sbr.rel (0) target = $region37
    $region36: #{tpu_custom_call.1} parent=1 // pred_region
      %s504 = ssub.s32 512, 512
      %505 = vsyncadd [#allocation5], %s504
      %s506 = sshll.u32 [#allocation8], 4
      %s507 = int_to_ptr.vmem [resolvable:$true] %s506
      %512 = dma.vmem_to_hbm [thread:$0]  %s507, 512, %s6, [#allocation5], 256, 256, 16
    $region37: #{tpu_custom_call.1} parent=1 // pred_fallthru
      _
    // Predicated region
    $region38: #{tpu_custom_call.1} parent=1 // pred_check
      _
    $region39: #{tpu_custom_call.1} parent=1 // pred_check_branch
      %514 = sbr.rel (0) target = $region41
    $region40: #{tpu_custom_call.1} parent=1 // pred_region
      %515 = dma.done [#allocation5], 512
    $region41: #{tpu_custom_call.1} parent=1 // pred_fallthru
      _
    %516 = vsyncpa [#allocation4], 1
    %517 = vsyncpa [#allocation7], 1
    %518 = vsyncpa [#allocation5], 1

</llo_original>
